<compile_context>
chip_gen: v7x
topology: tpu7x:2x2x1
jax: 0.10.0
libtpu: 0.0.40
codegen_flags: <defaults>
</compile_context>

<pallas_src>
import functools

import jax
import jax.numpy as jnp
from jax.experimental import pallas as pl
from jax.experimental.pallas import tpu as pltpu


# ----------------------------- kernel ---------------------------------------


def _label_embedder_kernel(labels_ref, drop_ref, w1_ref, b1_ref, w2_ref, b2_ref,
                           out_ref, *, approximate_gelu):
    # Token drop: zero the *input* labels of dropped rows (matches torch.where
    # in LabelEmbedder.token_drop) with a single fused VPU multiply.
    x = labels_ref[...] * (1.0 - drop_ref[...])                    # (TB, C) f32

    # Mlp: Linear -> GELU -> Linear.  bf16 weights, f32 MXU accumulation.
    h = jnp.dot(x.astype(jnp.bfloat16), w1_ref[...],
                preferred_element_type=jnp.float32) + b1_ref[...]
    # GELU kept in f32 (v5e VPU/EUP have no bf16).  approximate=True routes the
    # transcendental to the EUP tanh slot and keeps the VALU free on v6e/v7x.
    h = jax.nn.gelu(h, approximate=approximate_gelu)
    y = jnp.dot(h.astype(jnp.bfloat16), w2_ref[...],
                preferred_element_type=jnp.float32) + b2_ref[...]

    out_ref[...] = y.astype(out_ref.dtype)


# ----------------------------- helpers ---------------------------------------


def _round_up(x, m):
    return (x + m - 1) // m * m


def _choose_batch_tiling(B, max_rows_per_tile=512):
    """Sublane-aligned batch tile that (a) divides the padded batch exactly (so
    no extra batch padding beyond 8-row alignment), (b) yields >= 2 grid steps
    whenever possible (v7x megacore sharding + DMA/compute pipelining), and
    (c) stays <= max_rows_per_tile rows (amortizes ~0.35us/step, fits VMEM)."""
    Bp = _round_up(B, 8)
    nb = Bp // 8                      # number of 8-row sublane blocks
    best = 1
    for d in range(1, nb + 1):
        if nb % d:
            continue
        rows = d * 8
        if rows > max_rows_per_tile:
            break
        n_tiles = nb // d
        if n_tiles >= 2 or nb == 1:   # single tile only when unavoidable
            best = d
    TB = best * 8
    return Bp, TB, Bp // TB


def prepare_label_embedder_params(params):
    """One-time (init-time) weight prep: pad the hidden dim to a lane-dense
    multiple of 128 and cast weights to bf16.  Cache the result and reuse it on
    every forward call -- do NOT call this per step."""
    w1, b1, w2, b2 = params["w1"], params["b1"], params["w2"], params["b2"]
    C, H = w1.shape
    Hp = _round_up(H, 128)
    ph = Hp - H
    return {
        "C": int(C), "H": int(H), "Hp": int(Hp),
        "w1": jnp.pad(w1, ((0, 0), (0, ph))).astype(jnp.bfloat16),
        "b1": jnp.pad(jnp.reshape(b1, (1, H)), ((0, 0), (0, ph))).astype(jnp.float32),
        "w2": jnp.pad(w2, ((0, ph), (0, ph))).astype(jnp.bfloat16),
        "b2": jnp.pad(jnp.reshape(b2, (1, H)), ((0, 0), (0, ph))).astype(jnp.float32),
    }


# ----------------------------- wrapper ---------------------------------------


def label_embedder_pallas(labels, drop_flags, prepared, *,
                          out_dtype=jnp.float32, approximate_gelu=True):
    """labels: (B, C) f32; drop_flags: (B, 1) f32 in {0., 1.};
    prepared: output of prepare_label_embedder_params  ->  (B, H) out_dtype."""
    B, C = labels.shape
    assert C == prepared["C"], "labels cond_dim does not match prepared params"
    H, Hp = prepared["H"], prepared["Hp"]

    Bp, TB, n_tiles = _choose_batch_tiling(B)

    labels_p = labels if Bp == B else jnp.pad(labels, ((0, Bp - B), (0, 0)))
    drop_p = drop_flags if Bp == B else jnp.pad(drop_flags, ((0, Bp - B), (0, 0)))

    out_bytes = jnp.dtype(out_dtype).itemsize
    C_lanes = _round_up(C, 128)
    C_sub = _round_up(C, 8)
    # Streams are double-buffered by the pipeline; drop tile is lane-padded to
    # 128 lanes in VMEM; biases are sublane-padded to 8 rows.
    stream_bytes = 2 * (TB * C_lanes * 4 + TB * 128 * 4 + TB * Hp * out_bytes)
    weight_bytes = 2 * (C_sub * Hp * 2 + 8 * Hp * 4 + Hp * Hp * 2 + 8 * Hp * 4)
    scratch_bytes = 2 * TB * Hp * 4 + TB * C_lanes * 4   # f32 intermediates h, y, x
    need = stream_bytes + weight_bytes + scratch_bytes
    vmem_limit = int(min(max(int(1.5 * need), 16 << 20), 48 << 20))

    cost = pl.CostEstimate(
        flops=2 * Bp * C * Hp + 2 * Bp * Hp * Hp,
        transcendentals=Bp * Hp,
        bytes_accessed=(Bp * C * 4 + Bp * 4 + C * Hp * 2 + Hp * Hp * 2
                        + 2 * Hp * 4 + Bp * Hp * out_bytes),
    )

    kernel = functools.partial(_label_embedder_kernel,
                               approximate_gelu=approximate_gelu)

    out_p = pl.pallas_call(
        kernel,
        out_shape=jax.ShapeDtypeStruct((Bp, Hp), out_dtype),
        grid=(n_tiles,),
        in_specs=[
            pl.BlockSpec((TB, C), lambda i: (i, 0)),     # labels (batch-blocked)
            pl.BlockSpec((TB, 1), lambda i: (i, 0)),     # drop flags
            pl.BlockSpec((C, Hp), lambda i: (0, 0)),     # w1 (resident, bf16)
            pl.BlockSpec((1, Hp), lambda i: (0, 0)),     # b1 (resident, f32)
            pl.BlockSpec((Hp, Hp), lambda i: (0, 0)),    # w2 (resident, bf16)
            pl.BlockSpec((1, Hp), lambda i: (0, 0)),     # b2 (resident, f32)
        ],
        out_specs=pl.BlockSpec((TB, Hp), lambda i: (i, 0)),
        compiler_params=pltpu.CompilerParams(
            dimension_semantics=("parallel",),
            vmem_limit_bytes=vmem_limit,
        ),
        cost_estimate=cost,
    )(labels_p, drop_p, prepared["w1"], prepared["b1"],
      prepared["w2"], prepared["b2"])

    if Bp != B or Hp != H:
        # Only pay the slice copy when padding was actually applied; DiT-sized
        # (128-aligned) hidden dims and 8-aligned batches take the no-copy path.
        out_p = out_p[:B, :H]
    return out_p


def label_embedder_forward(labels, *, prepared_params, dropout_prob, train,
                           force_drop_ids=None, rng_key=None,
                           out_dtype=jnp.float32, approximate_gelu=True):
    """Mirrors LabelEmbedder.forward(labels, train, force_drop_ids)."""
    B = labels.shape[0]
    use_dropout = dropout_prob > 0.0
    if (train and use_dropout) or (force_drop_ids is not None):
        if force_drop_ids is None:
            # torch.rand(B) < dropout_prob  (randomness drawn in the wrapper)
            drop = jax.random.uniform(rng_key, (B,)) < dropout_prob
        else:
            drop = (force_drop_ids == 1)
        drop_flags = drop.astype(jnp.float32).reshape(B, 1)
    else:
        drop_flags = jnp.zeros((B, 1), jnp.float32)

    return label_embedder_pallas(labels, drop_flags, prepared_params,
                                 out_dtype=out_dtype,
                                 approximate_gelu=approximate_gelu)


# ----------------------------- test harness ----------------------------------


def init_params(key, cond_dim, hidden_size):
    k1, k2, k3, k4 = jax.random.split(key, 4)
    w1 = jax.random.normal(k1, (cond_dim, hidden_size), jnp.float32) / jnp.sqrt(cond_dim)
    b1 = 0.01 * jax.random.normal(k2, (1, hidden_size), jnp.float32)
    w2 = jax.random.normal(k3, (hidden_size, hidden_size), jnp.float32) / jnp.sqrt(hidden_size)
    b2 = 0.01 * jax.random.normal(k4, (1, hidden_size), jnp.float32)
    return {"w1": w1, "b1": b1, "w2": w2, "b2": b2}


def _reference_same_recipe(labels, drop_flags, params, approximate_gelu=True):
    # Plain-JAX reference using the same bf16-weight / f32-accumulate recipe.
    x = labels * (1.0 - drop_flags)
    h = jnp.dot(x.astype(jnp.bfloat16), params["w1"].astype(jnp.bfloat16),
                preferred_element_type=jnp.float32) + params["b1"]
    h = jax.nn.gelu(h, approximate=approximate_gelu)
    y = jnp.dot(h.astype(jnp.bfloat16), params["w2"].astype(jnp.bfloat16),
                preferred_element_type=jnp.float32) + params["b2"]
    return y


def _reference_module_f32(labels, drop_flags, params):
    # Exact module semantics: f32 weights, erf-GELU (nn.GELU default).
    x = labels * (1.0 - drop_flags)
    h = jax.nn.gelu(x @ params["w1"] + params["b1"], approximate=False)
    return h @ params["w2"] + params["b2"]


if __name__ == "__main__":
    root = jax.random.PRNGKey(0)
    k_params, k_labels, k_params2, k_labels2 = jax.random.split(root, 4)

    # ---- Case A: small config (B=8, cond_dim=32, hidden=64) ----
    B, COND_DIM, HIDDEN = 8, 32, 64
    DROPOUT_PROB = 0.1

    params = init_params(k_params, COND_DIM, HIDDEN)
    prepared = prepare_label_embedder_params(params)   # one-time, at init
    labels = jax.random.normal(k_labels, (B, COND_DIM), jnp.float32)

    # Eval (no dropout path)
    out_eval = label_embedder_forward(labels, prepared_params=prepared,
                                      dropout_prob=DROPOUT_PROB, train=False)
    jax.block_until_ready(out_eval)

    # Forced drop ids (classifier-free guidance)
    force_drop_ids = jnp.array([1, 0, 1, 0, 0, 1, 0, 0], jnp.int32)
    out_cfg = label_embedder_forward(labels, prepared_params=prepared,
                                     dropout_prob=DROPOUT_PROB, train=True,
                                     force_drop_ids=force_drop_ids)
    jax.block_until_ready(out_cfg)

    zero_drop = jnp.zeros((B, 1), jnp.float32)
    cfg_drop = (force_drop_ids == 1).astype(jnp.float32).reshape(B, 1)

    assert out_eval.shape == (B, HIDDEN)
    assert out_cfg.shape == (B, HIDDEN)

    # Tight check vs a plain-JAX reference using the identical numeric recipe.
    assert jnp.allclose(out_eval, _reference_same_recipe(labels, zero_drop, params),
                        atol=2e-3, rtol=2e-3)
    assert jnp.allclose(out_cfg, _reference_same_recipe(labels, cfg_drop, params),
                        atol=2e-3, rtol=2e-3)

    # Loose check vs the exact f32 / erf-GELU module semantics
    # (bf16 weights + tanh-GELU => ~1e-2 scale deviation).
    assert jnp.allclose(out_eval, _reference_module_f32(labels, zero_drop, params),
                        atol=7e-2, rtol=7e-2)
    assert jnp.allclose(out_cfg, _reference_module_f32(labels, cfg_drop, params),
                        atol=7e-2, rtol=7e-2)

    # All dropped rows share the same "null" embedding MLP(0).
    assert jnp.allclose(out_cfg[0], out_cfg[2], atol=1e-5)
    assert jnp.allclose(out_cfg[0], out_cfg[5], atol=1e-5)

    # ---- Case B: 128-aligned hidden + batch that splits into >= 2 grid tiles
    #      (exercises the v7x two-tile path and the no-pad / no-slice path). ----
    B2, H2 = 256, 128
    params2 = init_params(k_params2, COND_DIM, H2)
    prepared2 = prepare_label_embedder_params(params2)
    labels2 = jax.random.normal(k_labels2, (B2, COND_DIM), jnp.float32)

    Bp2, TB2, n_tiles2 = _choose_batch_tiling(B2)
    assert (Bp2, TB2, n_tiles2) == (256, 128, 2)   # >= 2 tiles for megacore

    out2 = label_embedder_forward(labels2, prepared_params=prepared2,
                                  dropout_prob=0.0, train=False)
    jax.block_until_ready(out2)
    assert out2.shape == (B2, H2)
    assert jnp.allclose(out2,
                        _reference_same_recipe(labels2, jnp.zeros((B2, 1), jnp.float32),
                                               params2),
                        atol=2e-3, rtol=2e-3)

    print("KERNEL_OK")
</pallas_src>

<mosaic_0001>
module attributes {stable_mosaic.version = 11 : i64} {
  func.func @_label_embedder_kernel(%arg0: i32, %arg1: memref<8x32xf32, #tpu.memory_space<vmem>>, %arg2: memref<8x1xf32, #tpu.memory_space<vmem>>, %arg3: memref<32x128xbf16, #tpu.memory_space<vmem>>, %arg4: memref<1x128xf32, #tpu.memory_space<vmem>>, %arg5: memref<128x128xbf16, #tpu.memory_space<vmem>>, %arg6: memref<1x128xf32, #tpu.memory_space<vmem>>, %arg7: memref<8x128xf32, #tpu.memory_space<vmem>>) attributes {dimension_semantics = [#tpu.dimension_semantics<parallel>], iteration_bounds = array<i64: 1>, scalar_prefetch = 0 : i64, scratch_operands = 0 : i64, tpu.core_type = #tpu.core_type<tc>, window_params = [{transform_indices = @transform_0, window_bounds = array<i64: 8, 32>}, {transform_indices = @transform_1, window_bounds = array<i64: 8, 1>}, {pipeline_mode = #tpu.pipeline_mode<synchronous>, transform_indices = @transform_2, window_bounds = array<i64: 32, 128>}, {pipeline_mode = #tpu.pipeline_mode<synchronous>, transform_indices = @transform_3, window_bounds = array<i64: 1, 128>}, {pipeline_mode = #tpu.pipeline_mode<synchronous>, transform_indices = @transform_4, window_bounds = array<i64: 128, 128>}, {pipeline_mode = #tpu.pipeline_mode<synchronous>, transform_indices = @transform_5, window_bounds = array<i64: 1, 128>}, {transform_indices = @transform_6, window_bounds = array<i64: 8, 128>}]} {
    %c0 = arith.constant 0 : index
    %c0_0 = arith.constant 0 : index
    %0 = vector.load %arg1[%c0, %c0_0] : memref<8x32xf32, #tpu.memory_space<vmem>>, vector<8x32xf32>
    %c0_1 = arith.constant 0 : index
    %c0_2 = arith.constant 0 : index
    %1 = vector.load %arg2[%c0_1, %c0_2] : memref<8x1xf32, #tpu.memory_space<vmem>>, vector<8x1xf32>
    %cst = arith.constant 1.000000e+00 : f32
    %2 = vector.broadcast %cst : f32 to vector<8x1xf32>
    %3 = arith.subf %2, %1 : vector<8x1xf32>
    %4 = vector.broadcast %3 : vector<8x1xf32> to vector<8x32xf32>
    %5 = arith.mulf %0, %4 : vector<8x32xf32>
    %6 = arith.truncf %5 : vector<8x32xf32> to vector<8x32xbf16>
    %c0_3 = arith.constant 0 : index
    %c0_4 = arith.constant 0 : index
    %7 = vector.load %arg3[%c0_3, %c0_4] : memref<32x128xbf16, #tpu.memory_space<vmem>>, vector<32x128xbf16>
    %cst_5 = arith.constant dense<0.000000e+00> : vector<8x128xf32>
    %8 = tpu.matmul %6, %7, %cst_5 {dimension_numbers = #tpu.dot_dimension_numbers<[1], [0], [0], [1], [0, 0, 1, 1], [], []>} : vector<8x32xbf16>, vector<32x128xbf16>, vector<8x128xf32> -> vector<8x128xf32>
    %c0_6 = arith.constant 0 : index
    %c0_7 = arith.constant 0 : index
    %9 = vector.load %arg4[%c0_6, %c0_7] : memref<1x128xf32, #tpu.memory_space<vmem>>, vector<1x128xf32>
    %10 = vector.broadcast %9 : vector<1x128xf32> to vector<8x128xf32>
    %11 = arith.addf %8, %10 : vector<8x128xf32>
    %12 = arith.mulf %11, %11 : vector<8x128xf32>
    %13 = arith.mulf %11, %12 : vector<8x128xf32>
    %cst_8 = arith.constant 4.471500e-02 : f32
    %14 = vector.broadcast %cst_8 : f32 to vector<8x128xf32>
    %15 = arith.mulf %14, %13 : vector<8x128xf32>
    %16 = arith.addf %11, %15 : vector<8x128xf32>
    %cst_9 = arith.constant 0.797884583 : f32
    %17 = vector.broadcast %cst_9 : f32 to vector<8x128xf32>
    %18 = arith.mulf %17, %16 : vector<8x128xf32>
    %19 = math.tanh %18 : vector<8x128xf32>
    %cst_10 = arith.constant 1.000000e+00 : f32
    %20 = vector.broadcast %cst_10 : f32 to vector<8x128xf32>
    %21 = arith.addf %20, %19 : vector<8x128xf32>
    %cst_11 = arith.constant 5.000000e-01 : f32
    %22 = vector.broadcast %cst_11 : f32 to vector<8x128xf32>
    %23 = arith.mulf %22, %21 : vector<8x128xf32>
    %24 = arith.mulf %11, %23 : vector<8x128xf32>
    %25 = arith.truncf %24 : vector<8x128xf32> to vector<8x128xbf16>
    %c0_12 = arith.constant 0 : index
    %c0_13 = arith.constant 0 : index
    %26 = vector.load %arg5[%c0_12, %c0_13] : memref<128x128xbf16, #tpu.memory_space<vmem>>, vector<128x128xbf16>
    %cst_14 = arith.constant dense<0.000000e+00> : vector<8x128xf32>
    %27 = tpu.matmul %25, %26, %cst_14 {dimension_numbers = #tpu.dot_dimension_numbers<[1], [0], [0], [1], [0, 0, 1, 1], [], []>} : vector<8x128xbf16>, vector<128x128xbf16>, vector<8x128xf32> -> vector<8x128xf32>
    %c0_15 = arith.constant 0 : index
    %c0_16 = arith.constant 0 : index
    %28 = vector.load %arg6[%c0_15, %c0_16] : memref<1x128xf32, #tpu.memory_space<vmem>>, vector<1x128xf32>
    %29 = vector.broadcast %28 : vector<1x128xf32> to vector<8x128xf32>
    %30 = arith.addf %27, %29 : vector<8x128xf32>
    %c0_17 = arith.constant 0 : index
    %c0_18 = arith.constant 0 : index
    %31 = vector.load %arg7[%c0_17, %c0_18] : memref<8x128xf32, #tpu.memory_space<vmem>>, vector<8x128xf32>
    tpu.vector_store %arg7[%c0_17, %c0_18], %30 {strides = array<i32>} : memref<8x128xf32, #tpu.memory_space<vmem>>, vector<8x128xf32>,
    return
  }
  func.func @transform_0(%arg0: i32) -> (i32, i32) {
    %c0_i32 = arith.constant 0 : i32
    %c0_i32_0 = arith.constant 0 : i32
    return %arg0, %c0_i32 : i32, i32
  }
  func.func @transform_1(%arg0: i32) -> (i32, i32) {
    %c0_i32 = arith.constant 0 : i32
    %c0_i32_0 = arith.constant 0 : i32
    return %arg0, %c0_i32 : i32, i32
  }
  func.func @transform_2(%arg0: i32) -> (i32, i32) {
    %c0_i32 = arith.constant 0 : i32
    %c0_i32_0 = arith.constant 0 : i32
    %c0_i32_1 = arith.constant 0 : i32
    return %c0_i32, %c0_i32_0 : i32, i32
  }
  func.func @transform_3(%arg0: i32) -> (i32, i32) {
    %c0_i32 = arith.constant 0 : i32
    %c0_i32_0 = arith.constant 0 : i32
    %c0_i32_1 = arith.constant 0 : i32
    return %c0_i32, %c0_i32_0 : i32, i32
  }
  func.func @transform_4(%arg0: i32) -> (i32, i32) {
    %c0_i32 = arith.constant 0 : i32
    %c0_i32_0 = arith.constant 0 : i32
    %c0_i32_1 = arith.constant 0 : i32
    return %c0_i32, %c0_i32_0 : i32, i32
  }
  func.func @transform_5(%arg0: i32) -> (i32, i32) {
    %c0_i32 = arith.constant 0 : i32
    %c0_i32_0 = arith.constant 0 : i32
    %c0_i32_1 = arith.constant 0 : i32
    return %c0_i32, %c0_i32_0 : i32, i32
  }
  func.func @transform_6(%arg0: i32) -> (i32, i32) {
    %c0_i32 = arith.constant 0 : i32
    %c0_i32_0 = arith.constant 0 : i32
    return %arg0, %c0_i32 : i32, i32
  }
}

</mosaic_0001>

<llo_original>
// kernel: tpu_custom_call.1
$region0: #{tpu_custom_call.1}
  #allocation0 [shape = 'u32[]', space=smem, size = 0x4, offset = 0x4, fixed_abs, tag = 'smem constant byte address 0x4 - core index']
  #allocation1 [shape = 'u32[144,128]{1,0:T(1,128)}', space=vmem, size = 0x12000, scoped, tag = 'internal scratch']
  %s0 = inlined_call_operand.hbm [shape: f32[8,32], index: 0, kind: input, shape index: {}]
  %s1 = inlined_call_operand.vmem [shape: f32[8,1], index: 1, kind: input, shape index: {}]
  %s2 = inlined_call_operand.vmem [shape: bf16[32,128], index: 2, kind: input, shape index: {}]
  %s3 = inlined_call_operand.vmem [shape: f32[1,128], index: 3, kind: input, shape index: {}]
  %s4 = inlined_call_operand.hbm [shape: bf16[128,128], index: 4, kind: input, shape index: {}]
  %s5 = inlined_call_operand.vmem [shape: f32[1,128], index: 5, kind: input, shape index: {}]
  %s6 = inlined_call_operand.hbm [shape: f32[8,128], index: 6, kind: output, shape index: {}]
  %s7 = sld [smem:[#allocation0]]
  $region42: #{tpu_custom_call.1} parent=0
    _
  %s9 = ssub.s32 1, %s7
  %s10 = scalar_select 0, %s9, %s7
  $region1: #{tpu_custom_call.1} parent=0
    #allocation2 [shape = 'u8[4096]{0}', space=vmem, size = 0x1000, scoped, tag = 'input window, operand 0, single buffered']
    #allocation3 [shape = 's32[1]{0}', space=sflag, size = 0x4, scoped, tag = 'scoped memory for tpu_custom_call.1']
    #allocation4 [shape = 's32[1]{0}', space=sflag, size = 0x4, scoped, tag = 'scoped memory for tpu_custom_call.1']
    #allocation5 [shape = 'u8[32768]{0}', space=vmem, size = 0x8000, scoped, tag = 'input window, operand 4, single buffered']
    #allocation6 [shape = 's32[1]{0}', space=sflag, size = 0x4, scoped, tag = 'scoped memory for tpu_custom_call.1']
    #allocation7 [shape = 'u8[4096]{0}', space=vmem, size = 0x1000, scoped, tag = 'output window, operand 0, single buffered']
    %11 = vsyncpa [#allocation3], 0
    %12 = vsyncpa [#allocation6], 0
    %13 = vsyncpa [#allocation4], 0
    // Predicated region
    $region2: #{tpu_custom_call.1} parent=1 // pred_check
      _
    $region3: #{tpu_custom_call.1} parent=1 // pred_check_branch
      %15 = sbr.rel (0) target = $region5
    $region4: #{tpu_custom_call.1} parent=1 // pred_region
      %s17 = ssub.s32 128, 128
      %18 = vsyncadd [#allocation3], %s17
      %s20 = sshll.u32 [#allocation2], 4
      %s21 = int_to_ptr.vmem [resolvable:$true] %s20
      %23 = dma.hbm_to_vmem [thread:$0]  %s0, 128, %s21, [#allocation3]
    $region5: #{tpu_custom_call.1} parent=1 // pred_fallthru
      _
    // Predicated region
    $region6: #{tpu_custom_call.1} parent=1 // pred_check
      _
    $region7: #{tpu_custom_call.1} parent=1 // pred_check_branch
      %25 = sbr.rel (0) target = $region9
    $region8: #{tpu_custom_call.1} parent=1 // pred_region
      _
    $region9: #{tpu_custom_call.1} parent=1 // pred_fallthru
      _
    // Predicated region
    $region10: #{tpu_custom_call.1} parent=1 // pred_check
      _
    $region11: #{tpu_custom_call.1} parent=1 // pred_check_branch
      %27 = sbr.rel (0) target = $region13
    $region12: #{tpu_custom_call.1} parent=1 // pred_region
      _
    $region13: #{tpu_custom_call.1} parent=1 // pred_fallthru
      _
    // Predicated region
    $region14: #{tpu_custom_call.1} parent=1 // pred_check
      _
    $region15: #{tpu_custom_call.1} parent=1 // pred_check_branch
      %29 = sbr.rel (0) target = $region17
    $region16: #{tpu_custom_call.1} parent=1 // pred_region
      _
    $region17: #{tpu_custom_call.1} parent=1 // pred_fallthru
      _
    // Predicated region
    $region18: #{tpu_custom_call.1} parent=1 // pred_check
      _
    $region19: #{tpu_custom_call.1} parent=1 // pred_check_branch
      %31 = sbr.rel (0) target = $region21
    $region20: #{tpu_custom_call.1} parent=1 // pred_region
      %s33 = ssub.s32 1024, 1024
      %34 = vsyncadd [#allocation6], %s33
      %s35 = sshll.u32 [#allocation5], 4
      %s36 = int_to_ptr.vmem [resolvable:$true] %s35
      %41 = dma.hbm_to_vmem [thread:$0]  %s4, 1024, %s36, [#allocation6], 64, 64, 4
    $region21: #{tpu_custom_call.1} parent=1 // pred_fallthru
      _
    // Predicated region
    $region22: #{tpu_custom_call.1} parent=1 // pred_check
      _
    $region23: #{tpu_custom_call.1} parent=1 // pred_check_branch
      %43 = sbr.rel (0) target = $region25
    $region24: #{tpu_custom_call.1} parent=1 // pred_region
      _
    $region25: #{tpu_custom_call.1} parent=1 // pred_fallthru
      _
    // Predicated region
    $region26: #{tpu_custom_call.1} parent=1 // pred_check
      _
    $region27: #{tpu_custom_call.1} parent=1 // pred_check_branch
      %45 = sbr.rel (0) target = $region29
    $region28: #{tpu_custom_call.1} parent=1 // pred_region
      %46 = dma.done [#allocation3], 128
    $region29: #{tpu_custom_call.1} parent=1 // pred_fallthru
      _
    // Predicated region
    $region30: #{tpu_custom_call.1} parent=1 // pred_check
      _
    $region31: #{tpu_custom_call.1} parent=1 // pred_check_branch
      %48 = sbr.rel (0) target = $region33
    $region32: #{tpu_custom_call.1} parent=1 // pred_region
      %49 = dma.done [#allocation6], 1024
    $region33: #{tpu_custom_call.1} parent=1 // pred_fallthru
      _
    %v51 = vld [vmem:[#allocation2] sm:$0xff]
    %v52 = vld [vmem:[%s1] sm:$0xff]
    %v53 = vsub.f32 1.0, %v52
    %55 = vset.pattern.permute.xlu0 0
    %56 = vperm.xlu0 %55, %v53
    %v57 = vpop.permute.xlu0 %56
    %v59 = vmul.f32 %v51, %v57
    %v60 = vpack.c.bf16 %v59, %v59
    %v61 = vld [vmem:[%s2] sm:$0xf]
    %v62 = vld [vmem:[%s2 + $0x4] sm:$0xf]
    %v63 = vld [vmem:[%s2 + $0x8] sm:$0xf]
    %v64 = vld [vmem:[%s2 + $0xc] sm:$0xf]
    %v65 = vld [vmem:[%s3] sm:$0x1]
    %v67 = vlaneseq
    %v68 = vshrl.u32 %v67, 7
    %v69 = vsub.s32 0, %v68
    %v70 = vrot.slane %v65, %v69
    %v76 = vunpack.c.l.b16 %v61
    %v77 = vunpack.c.l.b16 %v62
    %v78 = vunpack.c.l.b16 %v63
    %v79 = vunpack.c.l.b16 %v64
    %v80 = vpack.c.b16 %v77, %v76
    %v81 = vpack.c.b16 %v79, %v78
    %vm84 = vcmask 261120
    %v86 = vsel %vm84, %v60, 0
    %88 = vmatprep.subr.bf16.mxu0 0
    %89 = vmatpush1.bf16.msra.mxu0 %v80
    %90 = vmatprep.subr.bf16.mxu0 0
    %91 = vmatpush1.bf16.msra.mxu0 %v81
    %92 = vmatprep.subr.bf16.mxu0 0
    %93 = vmatpush1.bf16.msra.mxu0 0
    %94 = vmatprep.subr.bf16.mxu0 0
    %95 = vmatpush1.bf16.msra.mxu0 0
    %96 = vmatprep.subr.bf16.mxu0 0
    %97 = vmatpush1.bf16.msra.mxu0 0
    %98 = vmatprep.subr.bf16.mxu0 0
    %99 = vmatpush1.bf16.msra.mxu0 0
    %100 = vmatprep.subr.bf16.mxu0 0
    %101 = vmatpush1.bf16.msra.mxu0 0
    %102 = vmatprep.subr.bf16.mxu0 0
    %103 = vmatpush1.bf16.msra.mxu0 0
    %104 = vmatprep.subr.bf16.mxu0 0
    %105 = vmatpush1.bf16.msra.mxu0 0
    %106 = vmatprep.subr.bf16.mxu0 0
    %107 = vmatpush1.bf16.msra.mxu0 0
    %108 = vmatprep.subr.bf16.mxu0 0
    %109 = vmatpush1.bf16.msra.mxu0 0
    %110 = vmatprep.subr.bf16.mxu0 0
    %111 = vmatpush1.bf16.msra.mxu0 0
    %112 = vmatprep.subr.bf16.mxu0 0
    %113 = vmatpush1.bf16.msra.mxu0 0
    %114 = vmatprep.subr.bf16.mxu0 0
    %115 = vmatpush1.bf16.msra.mxu0 0
    %116 = vmatprep.subr.bf16.mxu0 0
    %117 = vmatpush1.bf16.msra.mxu0 0
    %118 = vmatprep.subr.bf16.mxu0 0
    %119 = vmatpush1.bf16.msra.mxu0 0
    %120 = vmatprep.mubr.bf16.mxu0 0
    %121 = vmatmul.mubr.bf16.gmra.mrb[0].mxu0 %v86
    %v122 = vpop.f32.mrb[0].mxu0
    %v123 = vadd.f32 %v70, %v122
    %v124 = vpop.f32.mrb[0].mxu0
    %v125 = vpop.f32.mrb[0].mxu0
    %v126 = vpop.f32.mrb[0].mxu0
    %127 = vdwg.mxu0
    %v128 = vmul.f32 %v123, %v123
    %v129 = vmul.f32 %v123, %v128
    %v130 = vmul.f32 %v129, 0.044715
    %v131 = vadd.f32 %v123, %v130
    %v132 = vmul.f32 %v131, 0.7978846
    %v133 = vtanh.pop %v132
    %v134 = vadd.f32 %v133, 1.0
    %v135 = vmul.f32 %v134, 0.5
    %v136 = vmul.f32 %v123, %v135
    %v137 = vpack.c.bf16 %v136, %v136
    %v138 = vld [vmem:[#allocation5] sm:$0xf]
    %v139 = vld [vmem:[#allocation5 + $0x4] sm:$0xf]
    %v140 = vld [vmem:[#allocation5 + $0x8] sm:$0xf]
    %v141 = vld [vmem:[#allocation5 + $0xc] sm:$0xf]
    %v142 = vld [vmem:[#allocation5 + $0x10] sm:$0xf]
    %v143 = vld [vmem:[#allocation5 + $0x14] sm:$0xf]
    %v144 = vld [vmem:[#allocation5 + $0x18] sm:$0xf]
    %v145 = vld [vmem:[#allocation5 + $0x1c] sm:$0xf]
    %v146 = vld [vmem:[#allocation5 + $0x20] sm:$0xf]
    %v147 = vld [vmem:[#allocation5 + $0x24] sm:$0xf]
    %v148 = vld [vmem:[#allocation5 + $0x28] sm:$0xf]
    %v149 = vld [vmem:[#allocation5 + $0x2c] sm:$0xf]
    %v150 = vld [vmem:[#allocation5 + $0x30] sm:$0xf]
    %v151 = vld [vmem:[#allocation5 + $0x34] sm:$0xf]
    %v152 = vld [vmem:[#allocation5 + $0x38] sm:$0xf]
    %v153 = vld [vmem:[#allocation5 + $0x3c] sm:$0xf]
    %v154 = vld [vmem:[%s5] sm:$0x1]
    %v156 = vlaneseq
    %v157 = vshrl.u32 %v156, 7
    %v158 = vsub.s32 0, %v157
    %v159 = vrot.slane %v154, %v158
    %v177 = vunpack.c.l.b16 %v138
    %v178 = vunpack.c.l.b16 %v139
    %v179 = vunpack.c.l.b16 %v140
    %v180 = vunpack.c.l.b16 %v141
    %v181 = vunpack.c.l.b16 %v142
    %v182 = vunpack.c.l.b16 %v143
    %v183 = vunpack.c.l.b16 %v144
    %v184 = vunpack.c.l.b16 %v145
    %v185 = vunpack.c.l.b16 %v146
    %v186 = vunpack.c.l.b16 %v147
    %v187 = vunpack.c.l.b16 %v148
    %v188 = vunpack.c.l.b16 %v149
    %v189 = vunpack.c.l.b16 %v150
    %v190 = vunpack.c.l.b16 %v151
    %v191 = vunpack.c.l.b16 %v152
    %v192 = vunpack.c.l.b16 %v153
    %v193 = vpack.c.b16 %v178, %v177
    %v194 = vpack.c.b16 %v180, %v179
    %v195 = vpack.c.b16 %v182, %v181
    %v196 = vpack.c.b16 %v184, %v183
    %v197 = vpack.c.b16 %v186, %v185
    %v198 = vpack.c.b16 %v188, %v187
    %v199 = vpack.c.b16 %v190, %v189
    %v200 = vpack.c.b16 %v192, %v191
    %209 = vmatprep.subr.bf16.mxu0 0
    %210 = vmatpush1.bf16.msra.mxu0 %v193
    %211 = vmatprep.subr.bf16.mxu0 0
    %212 = vmatpush1.bf16.msra.mxu0 %v194
    %213 = vmatprep.subr.bf16.mxu0 0
    %214 = vmatpush1.bf16.msra.mxu0 %v195
    %215 = vmatprep.subr.bf16.mxu0 0
    %216 = vmatpush1.bf16.msra.mxu0 %v196
    %217 = vmatprep.subr.bf16.mxu0 0
    %218 = vmatpush1.bf16.msra.mxu0 %v197
    %219 = vmatprep.subr.bf16.mxu0 0
    %220 = vmatpush1.bf16.msra.mxu0 %v198
    %221 = vmatprep.subr.bf16.mxu0 0
    %222 = vmatpush1.bf16.msra.mxu0 %v199
    %223 = vmatprep.subr.bf16.mxu0 0
    %224 = vmatpush1.bf16.msra.mxu0 %v200
    %225 = vmatprep.subr.bf16.mxu0 0
    %226 = vmatpush1.bf16.msra.mxu0 0
    %227 = vmatprep.subr.bf16.mxu0 0
    %228 = vmatpush1.bf16.msra.mxu0 0
    %229 = vmatprep.subr.bf16.mxu0 0
    %230 = vmatpush1.bf16.msra.mxu0 0
    %231 = vmatprep.subr.bf16.mxu0 0
    %232 = vmatpush1.bf16.msra.mxu0 0
    %233 = vmatprep.subr.bf16.mxu0 0
    %234 = vmatpush1.bf16.msra.mxu0 0
    %235 = vmatprep.subr.bf16.mxu0 0
    %236 = vmatpush1.bf16.msra.mxu0 0
    %237 = vmatprep.subr.bf16.mxu0 0
    %238 = vmatpush1.bf16.msra.mxu0 0
    %239 = vmatprep.subr.bf16.mxu0 0
    %240 = vmatpush1.bf16.msra.mxu0 0
    %241 = vmatprep.mubr.bf16.mxu0 0
    %242 = vmatmul.mubr.bf16.gmra.mrb[0].mxu0 %v137
    %v243 = vpop.f32.mrb[0].mxu0
    %v244 = vadd.f32 %v159, %v243
    %v245 = vpop.f32.mrb[0].mxu0
    %v246 = vpop.f32.mrb[0].mxu0
    %v247 = vpop.f32.mrb[0].mxu0
    %248 = vdwg.mxu0
    %249 = vst [vmem:[#allocation7] sm:$0xff] %v244
    // Predicated region
    $region34: #{tpu_custom_call.1} parent=1 // pred_check
      _
    $region35: #{tpu_custom_call.1} parent=1 // pred_check_branch
      %251 = sbr.rel (0) target = $region37
    $region36: #{tpu_custom_call.1} parent=1 // pred_region
      %s253 = ssub.s32 128, 128
      %254 = vsyncadd [#allocation4], %s253
      %s256 = sshll.u32 [#allocation7], 4
      %s257 = int_to_ptr.vmem [resolvable:$true] %s256
      %259 = dma.vmem_to_hbm [thread:$0]  %s257, 128, %s6, [#allocation4]
    $region37: #{tpu_custom_call.1} parent=1 // pred_fallthru
      _
    // Predicated region
    $region38: #{tpu_custom_call.1} parent=1 // pred_check
      _
    $region39: #{tpu_custom_call.1} parent=1 // pred_check_branch
      %261 = sbr.rel (0) target = $region41
    $region40: #{tpu_custom_call.1} parent=1 // pred_region
      %262 = dma.done [#allocation4], 128
    $region41: #{tpu_custom_call.1} parent=1 // pred_fallthru
      _
    %263 = vsyncpa [#allocation3], 1
    %264 = vsyncpa [#allocation6], 1
    %265 = vsyncpa [#allocation4], 1

</llo_original>
